<compile_context>
chip_gen: v5e
topology: v5e:2x2
jax: 0.10.0
libtpu: 0.0.40
codegen_flags: <defaults>
</compile_context>

<pallas_src>
import jax
import jax.numpy as jnp
from jax.experimental import pallas as pl
from jax.experimental.pallas import tpu as pltpu


def _soft_iou_kernel(x_ref, t_ref, inter_ref, union_ref):
    # x_ref:     (1, C, St, 128)  logits tile of one batch element
    # t_ref:     (1, St, 128)     int32 label tile
    # inter_ref: (1, C, 1, 1)     per-(n, c) intersection accumulator
    # union_ref: (1, C, 1, 1)     per-(n, c) union accumulator
    j = pl.program_id(1)

    @pl.when(j == 0)
    def _():
        inter_ref[...] = jnp.zeros_like(inter_ref)
        union_ref[...] = jnp.zeros_like(union_ref)

    num_classes = x_ref.shape[1]
    t = t_ref[0]                                        # (St, 128) int32

    # Per-class logits slices; upcast to f32 in-kernel (inputs may be bf16).
    xs = [x_ref[0, c].astype(jnp.float32) for c in range(num_classes)]

    # Class-axis softmax as full-width VPU elementwise ops over the C slices
    # (no sublane reductions: the class axis is a leading loop axis).
    m = xs[0]
    for c in range(1, num_classes):
        m = jnp.maximum(m, xs[c])
    es = [jnp.exp(xc - m) for xc in xs]
    denom = es[0]
    for c in range(1, num_classes):
        denom = denom + es[c]
    inv_denom = pl.reciprocal(denom)                    # one exact recip / pixel

    def tile_sum(a):                                    # (St, 128) -> (1, 1)
        return jnp.sum(jnp.sum(a, axis=1, keepdims=True), axis=0, keepdims=True)

    for c in range(num_classes):
        p_c = es[c] * inv_denom                         # (St, 128) softmax prob
        mask = t == c                                   # (St, 128) bool
        inter_c = tile_sum(jnp.where(mask, p_c, 0.0))
        count_c = tile_sum(mask.astype(jnp.float32))
        # union = sum(p) + sum(onehot) - sum(p*onehot), without the one-hot.
        union_c = tile_sum(p_c) + count_c - inter_c
        inter_ref[0, c] = inter_ref[0, c] + inter_c
        union_ref[0, c] = union_ref[0, c] + union_c


def _pick_spatial_tile(s, c, itemsize):
    """Sublane rows per grid step: VMEM-friendly and (sublane, lane) aligned."""
    align = max(8, 32 // max(1, itemsize))      # f32 -> 8, bf16 -> 16, int8 -> 32
    # Target ~1 MiB per logits block so the double-buffered working set plus
    # in-kernel intermediates stays well under the v7x 32 MiB scoped default.
    max_st = (1 << 20) // max(1, c * 128 * itemsize)
    max_st = min(max(align, max_st), 1024)
    if s <= max_st:
        return s                                # whole image fits -> full block
    best = None
    for cand in range(align, max_st + 1, align):
        if s % cand == 0:
            best = cand
    return best if best is not None else s      # fall back to a full block


def soft_iou_loss(inputs, target, n_classes=2):
    """inputs: (N, C, H, W) float logits; target: (N, H, W) integer labels."""
    n, c, h, w = inputs.shape
    assert c == n_classes
    hw = h * w
    assert hw % 128 == 0, "H*W must be a multiple of 128 (TPU lane width)"
    s = hw // 128

    # Keep the incoming logits dtype (bf16 stays bf16 in HBM; cast in-kernel).
    x = inputs.reshape(n, c, s, 128)
    t = target.reshape(n, s, 128).astype(jnp.int32)
    # TODO(synk): labels could be stored as int8 to cut label HBM traffic 4x.

    st = _pick_spatial_tile(s, c, jnp.dtype(x.dtype).itemsize)
    num_spatial = s // st

    inter, union = pl.pallas_call(
        _soft_iou_kernel,
        out_shape=(
            jax.ShapeDtypeStruct((n, c, 1, 1), jnp.float32),
            jax.ShapeDtypeStruct((n, c, 1, 1), jnp.float32),
        ),
        grid_spec=pltpu.PrefetchScalarGridSpec(
            num_scalar_prefetch=0,
            grid=(n, num_spatial),
            in_specs=[
                pl.BlockSpec((1, c, st, 128), lambda i, j: (i, 0, j, 0)),
                pl.BlockSpec((1, st, 128), lambda i, j: (i, j, 0)),
            ],
            out_specs=[
                pl.BlockSpec((1, c, 1, 1), lambda i, j: (i, 0, 0, 0)),
                pl.BlockSpec((1, c, 1, 1), lambda i, j: (i, 0, 0, 0)),
            ],
        ),
        compiler_params=pltpu.CompilerParams(
            dimension_semantics=("parallel", "arbitrary"),
        ),
    )(x, t)

    iou = inter.reshape(n, c) / union.reshape(n, c)
    return 1.0 - jnp.mean(iou)


def soft_iou_loss_ref(inputs, target, n_classes=2):
    n, c, h, w = inputs.shape
    onehot = jax.nn.one_hot(target, c, axis=1, dtype=jnp.float32)  # (N,C,H,W)
    p = jax.nn.softmax(inputs, axis=1)
    inter = (p * onehot).reshape(n, c, -1).sum(2)
    union = (p + onehot - p * onehot).reshape(n, c, -1).sum(2)
    iou = inter / union
    return 1.0 - iou.mean()


if __name__ == "__main__":
    key = jax.random.PRNGKey(0)
    k1, k2 = jax.random.split(key)

    N, C, H, W = 2, 4, 16, 16
    inputs = jax.random.normal(k1, (N, C, H, W), dtype=jnp.float32)
    target = jax.random.randint(k2, (N, H, W), 0, C, dtype=jnp.int32)

    loss = soft_iou_loss(inputs, target, n_classes=C)
    jax.block_until_ready(loss)

    ref = soft_iou_loss_ref(inputs, target, n_classes=C)
    assert jnp.allclose(loss, ref, atol=1e-5, rtol=1e-5), (loss, ref)

    print("KERNEL_OK")
</pallas_src>

<mosaic_0001>
module attributes {stable_mosaic.version = 11 : i64} {
  func.func @_soft_iou_kernel(%arg0: i32, %arg1: i32, %arg2: memref<1x4x2x128xf32, #tpu.memory_space<vmem>>, %arg3: memref<1x2x128xi32, #tpu.memory_space<vmem>>, %arg4: memref<1x4x1x1xf32, #tpu.memory_space<vmem>>, %arg5: memref<1x4x1x1xf32, #tpu.memory_space<vmem>>) attributes {dimension_semantics = [#tpu.dimension_semantics<parallel>, #tpu.dimension_semantics<arbitrary>], iteration_bounds = array<i64: 2, 1>, scalar_prefetch = 0 : i64, scratch_operands = 0 : i64, tpu.core_type = #tpu.core_type<tc>, window_params = [{transform_indices = @transform_0, window_bounds = array<i64: 1, 4, 2, 128>}, {transform_indices = @transform_1, window_bounds = array<i64: 1, 2, 128>}, {transform_indices = @transform_2, window_bounds = array<i64: 1, 4, 1, 1>}, {transform_indices = @transform_3, window_bounds = array<i64: 1, 4, 1, 1>}]} {
    %c0_i32 = arith.constant 0 : i32
    %0 = arith.cmpi eq, %arg1, %c0_i32 : i32
    %1 = arith.extui %0 : i1 to i32
    %c0_i32_0 = arith.constant 0 : i32
    %2 = arith.cmpi ne, %1, %c0_i32_0 : i32
    scf.if %2 {
      %cst_108 = arith.constant 0.000000e+00 : f32
      %160 = vector.broadcast %cst_108 : f32 to vector<1x4x1x1xf32>
      %c0_109 = arith.constant 0 : index
      %c0_110 = arith.constant 0 : index
      %c0_111 = arith.constant 0 : index
      %c0_112 = arith.constant 0 : index
      %161 = vector.load %arg4[%c0_109, %c0_110, %c0_111, %c0_112] : memref<1x4x1x1xf32, #tpu.memory_space<vmem>>, vector<1x4x1x1xf32>
      tpu.vector_store %arg4[%c0_109, %c0_110, %c0_111, %c0_112], %160 {strides = array<i32>} : memref<1x4x1x1xf32, #tpu.memory_space<vmem>>, vector<1x4x1x1xf32>,
      %cst_113 = arith.constant 0.000000e+00 : f32
      %162 = vector.broadcast %cst_113 : f32 to vector<1x4x1x1xf32>
      %c0_114 = arith.constant 0 : index
      %c0_115 = arith.constant 0 : index
      %c0_116 = arith.constant 0 : index
      %c0_117 = arith.constant 0 : index
      %163 = vector.load %arg5[%c0_114, %c0_115, %c0_116, %c0_117] : memref<1x4x1x1xf32, #tpu.memory_space<vmem>>, vector<1x4x1x1xf32>
      tpu.vector_store %arg5[%c0_114, %c0_115, %c0_116, %c0_117], %162 {strides = array<i32>} : memref<1x4x1x1xf32, #tpu.memory_space<vmem>>, vector<1x4x1x1xf32>,
    } else {
    }
    %c0 = arith.constant 0 : index
    %c0_1 = arith.constant 0 : index
    %c0_2 = arith.constant 0 : index
    %3 = vector.load %arg3[%c0, %c0_1, %c0_2] : memref<1x2x128xi32, #tpu.memory_space<vmem>>, vector<1x2x128xi32>
    %4 = vector.shape_cast %3 : vector<1x2x128xi32> to vector<2x128xi32>
    %c0_3 = arith.constant 0 : index
    %c0_4 = arith.constant 0 : index
    %c0_5 = arith.constant 0 : index
    %c0_6 = arith.constant 0 : index
    %5 = vector.load %arg2[%c0_3, %c0_4, %c0_5, %c0_6] : memref<1x4x2x128xf32, #tpu.memory_space<vmem>>, vector<1x1x2x128xf32>
    %6 = vector.shape_cast %5 : vector<1x1x2x128xf32> to vector<2x128xf32>
    %c0_7 = arith.constant 0 : index
    %c1 = arith.constant 1 : index
    %c0_8 = arith.constant 0 : index
    %c0_9 = arith.constant 0 : index
    %7 = vector.load %arg2[%c0_7, %c1, %c0_8, %c0_9] : memref<1x4x2x128xf32, #tpu.memory_space<vmem>>, vector<1x1x2x128xf32>
    %8 = vector.shape_cast %7 : vector<1x1x2x128xf32> to vector<2x128xf32>
    %c0_10 = arith.constant 0 : index
    %c2 = arith.constant 2 : index
    %c0_11 = arith.constant 0 : index
    %c0_12 = arith.constant 0 : index
    %9 = vector.load %arg2[%c0_10, %c2, %c0_11, %c0_12] : memref<1x4x2x128xf32, #tpu.memory_space<vmem>>, vector<1x1x2x128xf32>
    %10 = vector.shape_cast %9 : vector<1x1x2x128xf32> to vector<2x128xf32>
    %c0_13 = arith.constant 0 : index
    %c3 = arith.constant 3 : index
    %c0_14 = arith.constant 0 : index
    %c0_15 = arith.constant 0 : index
    %11 = vector.load %arg2[%c0_13, %c3, %c0_14, %c0_15] : memref<1x4x2x128xf32, #tpu.memory_space<vmem>>, vector<1x1x2x128xf32>
    %12 = vector.shape_cast %11 : vector<1x1x2x128xf32> to vector<2x128xf32>
    %13 = arith.maximumf %6, %8 : vector<2x128xf32>
    %14 = arith.maximumf %13, %10 : vector<2x128xf32>
    %15 = arith.maximumf %14, %12 : vector<2x128xf32>
    %16 = arith.subf %6, %15 : vector<2x128xf32>
    %17 = math.exp %16 : vector<2x128xf32>
    %18 = arith.subf %8, %15 : vector<2x128xf32>
    %19 = math.exp %18 : vector<2x128xf32>
    %20 = arith.subf %10, %15 : vector<2x128xf32>
    %21 = math.exp %20 : vector<2x128xf32>
    %22 = arith.subf %12, %15 : vector<2x128xf32>
    %23 = math.exp %22 : vector<2x128xf32>
    %24 = arith.addf %17, %19 : vector<2x128xf32>
    %25 = arith.addf %24, %21 : vector<2x128xf32>
    %26 = arith.addf %25, %23 : vector<2x128xf32>
    %27 = tpu.reciprocal %26 : vector<2x128xf32> -> vector<2x128xf32>
    %28 = arith.mulf %17, %27 : vector<2x128xf32>
    %c0_i32_16 = arith.constant 0 : i32
    %29 = vector.broadcast %c0_i32_16 : i32 to vector<2x128xi32>
    %30 = arith.cmpi eq, %4, %29 : vector<2x128xi32>
    %cst = arith.constant 0.000000e+00 : f32
    %31 = vector.broadcast %cst : f32 to vector<2x128xf32>
    %32 = arith.select %30, %28, %31 : vector<2x128xi1>, vector<2x128xf32>
    %cst_17 = arith.constant dense<0.000000e+00> : vector<2xf32>
    %33 = vector.multi_reduction <add>, %32, %cst_17 [1] : vector<2x128xf32> to vector<2xf32>
    %34 = vector.shape_cast %33 : vector<2xf32> to vector<2x1xf32>
    %cst_18 = arith.constant dense<0.000000e+00> : vector<1xf32>
    %35 = vector.multi_reduction <add>, %34, %cst_18 [0] : vector<2x1xf32> to vector<1xf32>
    %36 = vector.shape_cast %35 : vector<1xf32> to vector<1x1xf32>
    %37 = arith.extui %30 : vector<2x128xi1> to vector<2x128xi32>
    %38 = arith.sitofp %37 : vector<2x128xi32> to vector<2x128xf32>
    %cst_19 = arith.constant dense<0.000000e+00> : vector<2xf32>
    %39 = vector.multi_reduction <add>, %38, %cst_19 [1] : vector<2x128xf32> to vector<2xf32>
    %40 = vector.shape_cast %39 : vector<2xf32> to vector<2x1xf32>
    %cst_20 = arith.constant dense<0.000000e+00> : vector<1xf32>
    %41 = vector.multi_reduction <add>, %40, %cst_20 [0] : vector<2x1xf32> to vector<1xf32>
    %42 = vector.shape_cast %41 : vector<1xf32> to vector<1x1xf32>
    %cst_21 = arith.constant dense<0.000000e+00> : vector<2xf32>
    %43 = vector.multi_reduction <add>, %28, %cst_21 [1] : vector<2x128xf32> to vector<2xf32>
    %44 = vector.shape_cast %43 : vector<2xf32> to vector<2x1xf32>
    %cst_22 = arith.constant dense<0.000000e+00> : vector<1xf32>
    %45 = vector.multi_reduction <add>, %44, %cst_22 [0] : vector<2x1xf32> to vector<1xf32>
    %46 = vector.shape_cast %45 : vector<1xf32> to vector<1x1xf32>
    %47 = arith.addf %46, %42 : vector<1x1xf32>
    %48 = arith.subf %47, %36 : vector<1x1xf32>
    %c0_23 = arith.constant 0 : index
    %c0_24 = arith.constant 0 : index
    %c0_25 = arith.constant 0 : index
    %c0_26 = arith.constant 0 : index
    %49 = vector.load %arg4[%c0_23, %c0_24, %c0_25, %c0_26] : memref<1x4x1x1xf32, #tpu.memory_space<vmem>>, vector<1x1x1x1xf32>
    %50 = vector.shape_cast %49 : vector<1x1x1x1xf32> to vector<1x1xf32>
    %51 = arith.addf %50, %36 : vector<1x1xf32>
    %c0_27 = arith.constant 0 : index
    %c0_28 = arith.constant 0 : index
    %c0_29 = arith.constant 0 : index
    %c0_30 = arith.constant 0 : index
    %52 = vector.load %arg4[%c0_27, %c0_28, %c0_29, %c0_30] : memref<1x4x1x1xf32, #tpu.memory_space<vmem>>, vector<1x1x1x1xf32>
    %53 = vector.shape_cast %52 : vector<1x1x1x1xf32> to vector<1x1xf32>
    %54 = vector.shape_cast %51 : vector<1x1xf32> to vector<1x1x1x1xf32>
    tpu.vector_store %arg4[%c0_27, %c0_28, %c0_29, %c0_30], %54 {strides = array<i32>} : memref<1x4x1x1xf32, #tpu.memory_space<vmem>>, vector<1x1x1x1xf32>,
    %c0_31 = arith.constant 0 : index
    %c0_32 = arith.constant 0 : index
    %c0_33 = arith.constant 0 : index
    %c0_34 = arith.constant 0 : index
    %55 = vector.load %arg5[%c0_31, %c0_32, %c0_33, %c0_34] : memref<1x4x1x1xf32, #tpu.memory_space<vmem>>, vector<1x1x1x1xf32>
    %56 = vector.shape_cast %55 : vector<1x1x1x1xf32> to vector<1x1xf32>
    %57 = arith.addf %56, %48 : vector<1x1xf32>
    %c0_35 = arith.constant 0 : index
    %c0_36 = arith.constant 0 : index
    %c0_37 = arith.constant 0 : index
    %c0_38 = arith.constant 0 : index
    %58 = vector.load %arg5[%c0_35, %c0_36, %c0_37, %c0_38] : memref<1x4x1x1xf32, #tpu.memory_space<vmem>>, vector<1x1x1x1xf32>
    %59 = vector.shape_cast %58 : vector<1x1x1x1xf32> to vector<1x1xf32>
    %60 = vector.shape_cast %57 : vector<1x1xf32> to vector<1x1x1x1xf32>
    tpu.vector_store %arg5[%c0_35, %c0_36, %c0_37, %c0_38], %60 {strides = array<i32>} : memref<1x4x1x1xf32, #tpu.memory_space<vmem>>, vector<1x1x1x1xf32>,
    %61 = arith.mulf %19, %27 : vector<2x128xf32>
    %c1_i32 = arith.constant 1 : i32
    %62 = vector.broadcast %c1_i32 : i32 to vector<2x128xi32>
    %63 = arith.cmpi eq, %4, %62 : vector<2x128xi32>
    %cst_39 = arith.constant 0.000000e+00 : f32
    %64 = vector.broadcast %cst_39 : f32 to vector<2x128xf32>
    %65 = arith.select %63, %61, %64 : vector<2x128xi1>, vector<2x128xf32>
    %cst_40 = arith.constant dense<0.000000e+00> : vector<2xf32>
    %66 = vector.multi_reduction <add>, %65, %cst_40 [1] : vector<2x128xf32> to vector<2xf32>
    %67 = vector.shape_cast %66 : vector<2xf32> to vector<2x1xf32>
    %cst_41 = arith.constant dense<0.000000e+00> : vector<1xf32>
    %68 = vector.multi_reduction <add>, %67, %cst_41 [0] : vector<2x1xf32> to vector<1xf32>
    %69 = vector.shape_cast %68 : vector<1xf32> to vector<1x1xf32>
    %70 = arith.extui %63 : vector<2x128xi1> to vector<2x128xi32>
    %71 = arith.sitofp %70 : vector<2x128xi32> to vector<2x128xf32>
    %cst_42 = arith.constant dense<0.000000e+00> : vector<2xf32>
    %72 = vector.multi_reduction <add>, %71, %cst_42 [1] : vector<2x128xf32> to vector<2xf32>
    %73 = vector.shape_cast %72 : vector<2xf32> to vector<2x1xf32>
    %cst_43 = arith.constant dense<0.000000e+00> : vector<1xf32>
    %74 = vector.multi_reduction <add>, %73, %cst_43 [0] : vector<2x1xf32> to vector<1xf32>
    %75 = vector.shape_cast %74 : vector<1xf32> to vector<1x1xf32>
    %cst_44 = arith.constant dense<0.000000e+00> : vector<2xf32>
    %76 = vector.multi_reduction <add>, %61, %cst_44 [1] : vector<2x128xf32> to vector<2xf32>
    %77 = vector.shape_cast %76 : vector<2xf32> to vector<2x1xf32>
    %cst_45 = arith.constant dense<0.000000e+00> : vector<1xf32>
    %78 = vector.multi_reduction <add>, %77, %cst_45 [0] : vector<2x1xf32> to vector<1xf32>
    %79 = vector.shape_cast %78 : vector<1xf32> to vector<1x1xf32>
    %80 = arith.addf %79, %75 : vector<1x1xf32>
    %81 = arith.subf %80, %69 : vector<1x1xf32>
    %c0_46 = arith.constant 0 : index
    %c1_47 = arith.constant 1 : index
    %c0_48 = arith.constant 0 : index
    %c0_49 = arith.constant 0 : index
    %82 = vector.load %arg4[%c0_46, %c1_47, %c0_48, %c0_49] : memref<1x4x1x1xf32, #tpu.memory_space<vmem>>, vector<1x1x1x1xf32>
    %83 = vector.shape_cast %82 : vector<1x1x1x1xf32> to vector<1x1xf32>
    %84 = arith.addf %83, %69 : vector<1x1xf32>
    %c0_50 = arith.constant 0 : index
    %c1_51 = arith.constant 1 : index
    %c0_52 = arith.constant 0 : index
    %c0_53 = arith.constant 0 : index
    %85 = vector.load %arg4[%c0_50, %c1_51, %c0_52, %c0_53] : memref<1x4x1x1xf32, #tpu.memory_space<vmem>>, vector<1x1x1x1xf32>
    %86 = vector.shape_cast %85 : vector<1x1x1x1xf32> to vector<1x1xf32>
    %87 = vector.shape_cast %84 : vector<1x1xf32> to vector<1x1x1x1xf32>
    tpu.vector_store %arg4[%c0_50, %c1_51, %c0_52, %c0_53], %87 {strides = array<i32>} : memref<1x4x1x1xf32, #tpu.memory_space<vmem>>, vector<1x1x1x1xf32>,
    %c0_54 = arith.constant 0 : index
    %c1_55 = arith.constant 1 : index
    %c0_56 = arith.constant 0 : index
    %c0_57 = arith.constant 0 : index
    %88 = vector.load %arg5[%c0_54, %c1_55, %c0_56, %c0_57] : memref<1x4x1x1xf32, #tpu.memory_space<vmem>>, vector<1x1x1x1xf32>
    %89 = vector.shape_cast %88 : vector<1x1x1x1xf32> to vector<1x1xf32>
    %90 = arith.addf %89, %81 : vector<1x1xf32>
    %c0_58 = arith.constant 0 : index
    %c1_59 = arith.constant 1 : index
    %c0_60 = arith.constant 0 : index
    %c0_61 = arith.constant 0 : index
    %91 = vector.load %arg5[%c0_58, %c1_59, %c0_60, %c0_61] : memref<1x4x1x1xf32, #tpu.memory_space<vmem>>, vector<1x1x1x1xf32>
    %92 = vector.shape_cast %91 : vector<1x1x1x1xf32> to vector<1x1xf32>
    %93 = vector.shape_cast %90 : vector<1x1xf32> to vector<1x1x1x1xf32>
    tpu.vector_store %arg5[%c0_58, %c1_59, %c0_60, %c0_61], %93 {strides = array<i32>} : memref<1x4x1x1xf32, #tpu.memory_space<vmem>>, vector<1x1x1x1xf32>,
    %94 = arith.mulf %21, %27 : vector<2x128xf32>
    %c2_i32 = arith.constant 2 : i32
    %95 = vector.broadcast %c2_i32 : i32 to vector<2x128xi32>
    %96 = arith.cmpi eq, %4, %95 : vector<2x128xi32>
    %cst_62 = arith.constant 0.000000e+00 : f32
    %97 = vector.broadcast %cst_62 : f32 to vector<2x128xf32>
    %98 = arith.select %96, %94, %97 : vector<2x128xi1>, vector<2x128xf32>
    %cst_63 = arith.constant dense<0.000000e+00> : vector<2xf32>
    %99 = vector.multi_reduction <add>, %98, %cst_63 [1] : vector<2x128xf32> to vector<2xf32>
    %100 = vector.shape_cast %99 : vector<2xf32> to vector<2x1xf32>
    %cst_64 = arith.constant dense<0.000000e+00> : vector<1xf32>
    %101 = vector.multi_reduction <add>, %100, %cst_64 [0] : vector<2x1xf32> to vector<1xf32>
    %102 = vector.shape_cast %101 : vector<1xf32> to vector<1x1xf32>
    %103 = arith.extui %96 : vector<2x128xi1> to vector<2x128xi32>
    %104 = arith.sitofp %103 : vector<2x128xi32> to vector<2x128xf32>
    %cst_65 = arith.constant dense<0.000000e+00> : vector<2xf32>
    %105 = vector.multi_reduction <add>, %104, %cst_65 [1] : vector<2x128xf32> to vector<2xf32>
    %106 = vector.shape_cast %105 : vector<2xf32> to vector<2x1xf32>
    %cst_66 = arith.constant dense<0.000000e+00> : vector<1xf32>
    %107 = vector.multi_reduction <add>, %106, %cst_66 [0] : vector<2x1xf32> to vector<1xf32>
    %108 = vector.shape_cast %107 : vector<1xf32> to vector<1x1xf32>
    %cst_67 = arith.constant dense<0.000000e+00> : vector<2xf32>
    %109 = vector.multi_reduction <add>, %94, %cst_67 [1] : vector<2x128xf32> to vector<2xf32>
    %110 = vector.shape_cast %109 : vector<2xf32> to vector<2x1xf32>
    %cst_68 = arith.constant dense<0.000000e+00> : vector<1xf32>
    %111 = vector.multi_reduction <add>, %110, %cst_68 [0] : vector<2x1xf32> to vector<1xf32>
    %112 = vector.shape_cast %111 : vector<1xf32> to vector<1x1xf32>
    %113 = arith.addf %112, %108 : vector<1x1xf32>
    %114 = arith.subf %113, %102 : vector<1x1xf32>
    %c0_69 = arith.constant 0 : index
    %c2_70 = arith.constant 2 : index
    %c0_71 = arith.constant 0 : index
    %c0_72 = arith.constant 0 : index
    %115 = vector.load %arg4[%c0_69, %c2_70, %c0_71, %c0_72] : memref<1x4x1x1xf32, #tpu.memory_space<vmem>>, vector<1x1x1x1xf32>
    %116 = vector.shape_cast %115 : vector<1x1x1x1xf32> to vector<1x1xf32>
    %117 = arith.addf %116, %102 : vector<1x1xf32>
    %c0_73 = arith.constant 0 : index
    %c2_74 = arith.constant 2 : index
    %c0_75 = arith.constant 0 : index
    %c0_76 = arith.constant 0 : index
    %118 = vector.load %arg4[%c0_73, %c2_74, %c0_75, %c0_76] : memref<1x4x1x1xf32, #tpu.memory_space<vmem>>, vector<1x1x1x1xf32>
    %119 = vector.shape_cast %118 : vector<1x1x1x1xf32> to vector<1x1xf32>
    %120 = vector.shape_cast %117 : vector<1x1xf32> to vector<1x1x1x1xf32>
    tpu.vector_store %arg4[%c0_73, %c2_74, %c0_75, %c0_76], %120 {strides = array<i32>} : memref<1x4x1x1xf32, #tpu.memory_space<vmem>>, vector<1x1x1x1xf32>,
    %c0_77 = arith.constant 0 : index
    %c2_78 = arith.constant 2 : index
    %c0_79 = arith.constant 0 : index
    %c0_80 = arith.constant 0 : index
    %121 = vector.load %arg5[%c0_77, %c2_78, %c0_79, %c0_80] : memref<1x4x1x1xf32, #tpu.memory_space<vmem>>, vector<1x1x1x1xf32>
    %122 = vector.shape_cast %121 : vector<1x1x1x1xf32> to vector<1x1xf32>
    %123 = arith.addf %122, %114 : vector<1x1xf32>
    %c0_81 = arith.constant 0 : index
    %c2_82 = arith.constant 2 : index
    %c0_83 = arith.constant 0 : index
    %c0_84 = arith.constant 0 : index
    %124 = vector.load %arg5[%c0_81, %c2_82, %c0_83, %c0_84] : memref<1x4x1x1xf32, #tpu.memory_space<vmem>>, vector<1x1x1x1xf32>
    %125 = vector.shape_cast %124 : vector<1x1x1x1xf32> to vector<1x1xf32>
    %126 = vector.shape_cast %123 : vector<1x1xf32> to vector<1x1x1x1xf32>
    tpu.vector_store %arg5[%c0_81, %c2_82, %c0_83, %c0_84], %126 {strides = array<i32>} : memref<1x4x1x1xf32, #tpu.memory_space<vmem>>, vector<1x1x1x1xf32>,
    %127 = arith.mulf %23, %27 : vector<2x128xf32>
    %c3_i32 = arith.constant 3 : i32
    %128 = vector.broadcast %c3_i32 : i32 to vector<2x128xi32>
    %129 = arith.cmpi eq, %4, %128 : vector<2x128xi32>
    %cst_85 = arith.constant 0.000000e+00 : f32
    %130 = vector.broadcast %cst_85 : f32 to vector<2x128xf32>
    %131 = arith.select %129, %127, %130 : vector<2x128xi1>, vector<2x128xf32>
    %cst_86 = arith.constant dense<0.000000e+00> : vector<2xf32>
    %132 = vector.multi_reduction <add>, %131, %cst_86 [1] : vector<2x128xf32> to vector<2xf32>
    %133 = vector.shape_cast %132 : vector<2xf32> to vector<2x1xf32>
    %cst_87 = arith.constant dense<0.000000e+00> : vector<1xf32>
    %134 = vector.multi_reduction <add>, %133, %cst_87 [0] : vector<2x1xf32> to vector<1xf32>
    %135 = vector.shape_cast %134 : vector<1xf32> to vector<1x1xf32>
    %136 = arith.extui %129 : vector<2x128xi1> to vector<2x128xi32>
    %137 = arith.sitofp %136 : vector<2x128xi32> to vector<2x128xf32>
    %cst_88 = arith.constant dense<0.000000e+00> : vector<2xf32>
    %138 = vector.multi_reduction <add>, %137, %cst_88 [1] : vector<2x128xf32> to vector<2xf32>
    %139 = vector.shape_cast %138 : vector<2xf32> to vector<2x1xf32>
    %cst_89 = arith.constant dense<0.000000e+00> : vector<1xf32>
    %140 = vector.multi_reduction <add>, %139, %cst_89 [0] : vector<2x1xf32> to vector<1xf32>
    %141 = vector.shape_cast %140 : vector<1xf32> to vector<1x1xf32>
    %cst_90 = arith.constant dense<0.000000e+00> : vector<2xf32>
    %142 = vector.multi_reduction <add>, %127, %cst_90 [1] : vector<2x128xf32> to vector<2xf32>
    %143 = vector.shape_cast %142 : vector<2xf32> to vector<2x1xf32>
    %cst_91 = arith.constant dense<0.000000e+00> : vector<1xf32>
    %144 = vector.multi_reduction <add>, %143, %cst_91 [0] : vector<2x1xf32> to vector<1xf32>
    %145 = vector.shape_cast %144 : vector<1xf32> to vector<1x1xf32>
    %146 = arith.addf %145, %141 : vector<1x1xf32>
    %147 = arith.subf %146, %135 : vector<1x1xf32>
    %c0_92 = arith.constant 0 : index
    %c3_93 = arith.constant 3 : index
    %c0_94 = arith.constant 0 : index
    %c0_95 = arith.constant 0 : index
    %148 = vector.load %arg4[%c0_92, %c3_93, %c0_94, %c0_95] : memref<1x4x1x1xf32, #tpu.memory_space<vmem>>, vector<1x1x1x1xf32>
    %149 = vector.shape_cast %148 : vector<1x1x1x1xf32> to vector<1x1xf32>
    %150 = arith.addf %149, %135 : vector<1x1xf32>
    %c0_96 = arith.constant 0 : index
    %c3_97 = arith.constant 3 : index
    %c0_98 = arith.constant 0 : index
    %c0_99 = arith.constant 0 : index
    %151 = vector.load %arg4[%c0_96, %c3_97, %c0_98, %c0_99] : memref<1x4x1x1xf32, #tpu.memory_space<vmem>>, vector<1x1x1x1xf32>
    %152 = vector.shape_cast %151 : vector<1x1x1x1xf32> to vector<1x1xf32>
    %153 = vector.shape_cast %150 : vector<1x1xf32> to vector<1x1x1x1xf32>
    tpu.vector_store %arg4[%c0_96, %c3_97, %c0_98, %c0_99], %153 {strides = array<i32>} : memref<1x4x1x1xf32, #tpu.memory_space<vmem>>, vector<1x1x1x1xf32>,
    %c0_100 = arith.constant 0 : index
    %c3_101 = arith.constant 3 : index
    %c0_102 = arith.constant 0 : index
    %c0_103 = arith.constant 0 : index
    %154 = vector.load %arg5[%c0_100, %c3_101, %c0_102, %c0_103] : memref<1x4x1x1xf32, #tpu.memory_space<vmem>>, vector<1x1x1x1xf32>
    %155 = vector.shape_cast %154 : vector<1x1x1x1xf32> to vector<1x1xf32>
    %156 = arith.addf %155, %147 : vector<1x1xf32>
    %c0_104 = arith.constant 0 : index
    %c3_105 = arith.constant 3 : index
    %c0_106 = arith.constant 0 : index
    %c0_107 = arith.constant 0 : index
    %157 = vector.load %arg5[%c0_104, %c3_105, %c0_106, %c0_107] : memref<1x4x1x1xf32, #tpu.memory_space<vmem>>, vector<1x1x1x1xf32>
    %158 = vector.shape_cast %157 : vector<1x1x1x1xf32> to vector<1x1xf32>
    %159 = vector.shape_cast %156 : vector<1x1xf32> to vector<1x1x1x1xf32>
    tpu.vector_store %arg5[%c0_104, %c3_105, %c0_106, %c0_107], %159 {strides = array<i32>} : memref<1x4x1x1xf32, #tpu.memory_space<vmem>>, vector<1x1x1x1xf32>,
    return
  }
  func.func @transform_0(%arg0: i32, %arg1: i32) -> (i32, i32, i32, i32) {
    %c0_i32 = arith.constant 0 : i32
    %c0_i32_0 = arith.constant 0 : i32
    %c0_i32_1 = arith.constant 0 : i32
    return %arg0, %c0_i32, %arg1, %c0_i32_0 : i32, i32, i32, i32
  }
  func.func @transform_1(%arg0: i32, %arg1: i32) -> (i32, i32, i32) {
    %c0_i32 = arith.constant 0 : i32
    %c0_i32_0 = arith.constant 0 : i32
    return %arg0, %arg1, %c0_i32 : i32, i32, i32
  }
  func.func @transform_2(%arg0: i32, %arg1: i32) -> (i32, i32, i32, i32) {
    %c0_i32 = arith.constant 0 : i32
    %c0_i32_0 = arith.constant 0 : i32
    %c0_i32_1 = arith.constant 0 : i32
    %c0_i32_2 = arith.constant 0 : i32
    return %arg0, %c0_i32, %c0_i32_0, %c0_i32_1 : i32, i32, i32, i32
  }
  func.func @transform_3(%arg0: i32, %arg1: i32) -> (i32, i32, i32, i32) {
    %c0_i32 = arith.constant 0 : i32
    %c0_i32_0 = arith.constant 0 : i32
    %c0_i32_1 = arith.constant 0 : i32
    %c0_i32_2 = arith.constant 0 : i32
    return %arg0, %c0_i32, %c0_i32_0, %c0_i32_1 : i32, i32, i32, i32
  }
}

</mosaic_0001>

<llo_original>
// kernel: tpu_custom_call.1
$region0: #{tpu_custom_call.1}
  #allocation0 [shape = 'u32[]', space=smem, size = 0x4, offset = 0x4, fixed_abs, tag = 'smem constant byte address 0x4 - core index']
  #allocation1 [shape = 'u32[72,128]{1,0:T(1,128)}', space=vmem, size = 0x9000, scoped, tag = 'internal scratch']
  %s0 = inlined_call_operand.hbm [shape: f32[2,4,2,128], index: 0, kind: input, shape index: {}]
  %s1 = inlined_call_operand.hbm [shape: s32[2,2,128], index: 1, kind: input, shape index: {}]
  %s2 = inlined_call_operand.vmem [shape: f32[2,4,1,1], index: 2, kind: output, shape index: {0}]
  %s3 = inlined_call_operand.vmem [shape: f32[2,4,1,1], index: 3, kind: output, shape index: {1}]
  %4 = xla_tuple %s2, %s3
  %s5 = sld [smem:[#allocation0]]
  $region61: #{tpu_custom_call.1} parent=0
    _
  %s7 = ssub.s32 1, %s5
  %s8 = scalar_select 0, %s7, %s5
  $region1: #{tpu_custom_call.1} parent=0
    #allocation2 [shape = 'u8[8192]{0}', space=vmem, size = 0x2000, scoped, tag = 'input window, operand 0']
    #allocation3 [shape = 's32[2]{0}', space=sflag, size = 0x8, scoped, tag = 'scoped memory for tpu_custom_call.1']
    #allocation4 [shape = 'u8[2048]{0}', space=vmem, size = 0x800, scoped, tag = 'input window, operand 1']
    #allocation5 [shape = 's32[2]{0}', space=sflag, size = 0x8, scoped, tag = 'scoped memory for tpu_custom_call.1']
    %9 = vsyncpa [#allocation3], 0
    %s10 = scalar_lea.sflag [#allocation3], 1
    %11 = vsyncpa %s10, 0
    %12 = vsyncpa [#allocation5], 0
    %s13 = scalar_lea.sflag [#allocation5], 1
    %14 = vsyncpa %s13, 0
    loop: start=0, step=1, limit=4
    $region2: #{tpu_custom_call.1} parent=1 // loop_pre_header
      _
    $region3: #{tpu_custom_call.1} parent=1 // loop_header
      %s16 = sphi 0, %s20
      %p17 = scmp.ge.s32.totalorder %s16, 4
      %s23 = sphi 0, %s35
      %s24 = sphi 0, %s31
      %s25 = sphi 0, %s23
      %s26 = sphi 0, %s24
      %s27 = sphi 0, %s25
      %s28 = sphi 0, %s26
      %s40 = sphi 0, %s42
      %s43 = sphi 0, %s40
      %s44 = sphi 0, %s43
      %s60 = sphi 0, %s44
      %s68 = sphi 0, %s70
      %s71 = sphi 0, %s68
      %s72 = sphi 0, %s71
      %s88 = sphi 0, %s72
      %s94 = sphi 0, %s96
      %s97 = sphi 0, %s94
      %s98 = sphi 0, %s97
      %s114 = sphi 0, %s98
      %s120 = sphi 0, %s122
      %s123 = sphi 0, %s120
      %s124 = sphi 0, %s123
      %s140 = sphi 0, %s124
    $region4: #{tpu_custom_call.1} parent=1 // loop_header_branch
      %19 = sbr.rel (%p17) target = $region8
    $region5: #{tpu_custom_call.1} parent=1 // loop_body
      %s21 = ssub.s32 %s16, 1
      %s22 = ssub.s32 %s16, 2
      %s29 = sadd.s32 1, %s24
      %p30 = scmp.ge.s32.totalorder %s29, 1
      %s31 = scalar_select %p30, 0, %s29
      %s32 = sadd.s32 1, %s23
      %s33 = scalar_select %p30, %s32, %s23
      %p34 = scmp.ge.s32.totalorder %s33, 2
      %s35 = scalar_select %p34, 0, %s33
      %s36 = ssub.s32 %s23, %s35
      %s37 = ssub.s32 %s24, %s31
      %s38 = sor.u32 %s36, %s37
      %p39 = scmp.eq.s32.totalorder %s38, 0
      %s41 = sadd.s32 %s40, 1
      %s42 = scalar_select %p39, %s40, %s41
      %p45 = pneg %p39
      %p46 = scmp.eq.s32.totalorder %s16, 1
      %p47 = por %p45, %p46
      %p48 = scmp.ne.s32.totalorder %s40, %s43
      %p49 = scmp.eq.s32.totalorder %s16, 0
      %p50 = por %p48, %p49
      %p51 = scmp.ne.s32.totalorder %s40, %s43
      %p52 = scmp.eq.s32.totalorder %s21, 1
      %p53 = por %p51, %p52
      %p54 = scmp.ne.s32.totalorder %s43, %s44
      %p55 = scmp.eq.s32.totalorder %s21, 0
      %p56 = por %p54, %p55
      %p57 = scmp.ne.s32.totalorder %s43, %s44
      %p58 = scmp.eq.s32.totalorder %s22, 1
      %p59 = por %p57, %p58
      %p61 = scmp.ne.s32.totalorder %s44, %s60
      %p62 = scmp.eq.s32.totalorder %s22, 0
      %p63 = por %p61, %p62
      %s64 = ssub.s32 %s23, %s35
      %s65 = ssub.s32 %s24, %s31
      %s66 = sor.u32 %s64, %s65
      %p67 = scmp.eq.s32.totalorder %s66, 0
      %s69 = sadd.s32 %s68, 1
      %s70 = scalar_select %p67, %s68, %s69
      %p73 = pneg %p67
      %p74 = scmp.eq.s32.totalorder %s16, 1
      %p75 = por %p73, %p74
      %p76 = scmp.ne.s32.totalorder %s68, %s71
      %p77 = scmp.eq.s32.totalorder %s16, 0
      %p78 = por %p76, %p77
      %p79 = scmp.ne.s32.totalorder %s68, %s71
      %p80 = scmp.eq.s32.totalorder %s21, 1
      %p81 = por %p79, %p80
      %p82 = scmp.ne.s32.totalorder %s71, %s72
      %p83 = scmp.eq.s32.totalorder %s21, 0
      %p84 = por %p82, %p83
      %p85 = scmp.ne.s32.totalorder %s71, %s72
      %p86 = scmp.eq.s32.totalorder %s22, 1
      %p87 = por %p85, %p86
      %p89 = scmp.ne.s32.totalorder %s72, %s88
      %p90 = scmp.eq.s32.totalorder %s22, 0
      %p91 = por %p89, %p90
      %s92 = ssub.s32 %s23, %s35
      %p93 = scmp.eq.s32.totalorder %s92, 0
      %s95 = sadd.s32 %s94, 1
      %s96 = scalar_select %p93, %s94, %s95
      %p99 = pneg %p93
      %p100 = scmp.eq.s32.totalorder %s16, 1
      %p101 = por %p99, %p100
      %p102 = scmp.ne.s32.totalorder %s94, %s97
      %p103 = scmp.eq.s32.totalorder %s16, 0
      %p104 = por %p102, %p103
      %p105 = scmp.ne.s32.totalorder %s94, %s97
      %p106 = scmp.eq.s32.totalorder %s21, 1
      %p107 = por %p105, %p106
      %p108 = scmp.ne.s32.totalorder %s97, %s98
      %p109 = scmp.eq.s32.totalorder %s21, 0
      %p110 = por %p108, %p109
      %p111 = scmp.ne.s32.totalorder %s97, %s98
      %p112 = scmp.eq.s32.totalorder %s22, 1
      %p113 = por %p111, %p112
      %p115 = scmp.ne.s32.totalorder %s98, %s114
      %p116 = scmp.eq.s32.totalorder %s22, 0
      %p117 = por %p115, %p116
      %s118 = ssub.s32 %s23, %s35
      %p119 = scmp.eq.s32.totalorder %s118, 0
      %s121 = sadd.s32 %s120, 1
      %s122 = scalar_select %p119, %s120, %s121
      %p125 = pneg %p119
      %p126 = scmp.eq.s32.totalorder %s16, 1
      %p127 = por %p125, %p126
      %p128 = scmp.ne.s32.totalorder %s120, %s123
      %p129 = scmp.eq.s32.totalorder %s16, 0
      %p130 = por %p128, %p129
      %p131 = scmp.ne.s32.totalorder %s120, %s123
      %p132 = scmp.eq.s32.totalorder %s21, 1
      %p133 = por %p131, %p132
      %p134 = scmp.ne.s32.totalorder %s123, %s124
      %p135 = scmp.eq.s32.totalorder %s21, 0
      %p136 = por %p134, %p135
      %p137 = scmp.ne.s32.totalorder %s123, %s124
      %p138 = scmp.eq.s32.totalorder %s22, 1
      %p139 = por %p137, %p138
      %p141 = scmp.ne.s32.totalorder %s124, %s140
      %p142 = scmp.eq.s32.totalorder %s22, 0
      %p143 = por %p141, %p142
      %p144 = scmp.le.s32.totalorder 1, %s16
      %p145 = scmp.lt.s32.totalorder %s16, 3
      %p146 = pnand %p144, %p145
      %p147 = pneg %p146
      // Predicated region
      $region9: #{tpu_custom_call.1} parent=5 // pred_check
        _
      $region10: #{tpu_custom_call.1} parent=5 // pred_check_branch
        %149 = sbr.rel (%p146) target = $region12
      $region11: #{tpu_custom_call.1} parent=5 // pred_region
        %s150 = ssub.s32 %s16, 1
      $region12: #{tpu_custom_call.1} parent=5 // pred_fallthru
        _
      %p151 = scmp.lt.s32.totalorder %s16, 2
      // Predicated region
      $region13: #{tpu_custom_call.1} parent=5 // pred_check
        %p152 = pneg %p151
      $region14: #{tpu_custom_call.1} parent=5 // pred_check_branch
        %154 = sbr.rel (%p152) target = $region16
      $region15: #{tpu_custom_call.1} parent=5 // pred_region
        // Predicated region
        $region17: #{tpu_custom_call.1} parent=15 // pred_check
          %p155 = pneg %p50
        $region18: #{tpu_custom_call.1} parent=15 // pred_check_branch
          %157 = sbr.rel (%p155) target = $region20
        $region19: #{tpu_custom_call.1} parent=15 // pred_region
          %s158 = sand.u32 %s40, 1
          %s159 = scalar_lea.sflag [#allocation3], %s158
          %s160 = sand.u32 %s40, 1
          %s161 = smul.addr %s160, 8
          %s162 = scalar_lea.vmem [#allocation2], %s161
          %164 = vsyncadd %s159, 0
          %s165 = smul.addr %s23, 4
          %s166 = sadd.s32 %s24, %s165
          %s167 = smul.addr %s166, 2
          %s168 = scalar_lea.hbm %s0, %s167
          %s169 = sshll.u32 %s168, 4
          %s170 = int_to_ptr.hbm [resolvable:$true] %s169
          %s171 = sshll.u32 %s162, 4
          %s172 = int_to_ptr.vmem [resolvable:$true] %s171
          %177 = dma.hbm_to_vmem [thread:$0]  %s170, 128, %s172, %s159, 32, 32, 2
        $region20: #{tpu_custom_call.1} parent=15 // pred_fallthru
          _
        // Predicated region
        $region21: #{tpu_custom_call.1} parent=15 // pred_check
          %p178 = pneg %p78
        $region22: #{tpu_custom_call.1} parent=15 // pred_check_branch
          %180 = sbr.rel (%p178) target = $region24
        $region23: #{tpu_custom_call.1} parent=15 // pred_region
          %s181 = sand.u32 %s68, 1
          %s182 = scalar_lea.sflag [#allocation5], %s181
          %s183 = sand.u32 %s68, 1
          %s184 = smul.addr %s183, 2
          %s185 = scalar_lea.vmem [#allocation4], %s184
          %187 = vsyncadd %s182, 0
          %s188 = sadd.s32 %s24, %s23
          %s189 = smul.addr %s188, 2
          %s190 = scalar_lea.hbm %s1, %s189
          %s192 = sshll.u32 %s190, 4
          %s193 = int_to_ptr.hbm [resolvable:$true] %s192
          %s194 = sshll.u32 %s185, 4
          %s195 = int_to_ptr.vmem [resolvable:$true] %s194
          %197 = dma.hbm_to_vmem [thread:$0]  %s193, 32, %s195, %s182
        $region24: #{tpu_custom_call.1} parent=15 // pred_fallthru
          _
      $region16: #{tpu_custom_call.1} parent=5 // pred_fallthru
        _
      %p198 = scmp.le.s32.totalorder 1, %s16
      %p199 = scmp.lt.s32.totalorder %s16, 3
      %p200 = pnand %p198, %p199
      %p201 = pneg %p200
      // Predicated region
      $region25: #{tpu_custom_call.1} parent=5 // pred_check
        _
      $region26: #{tpu_custom_call.1} parent=5 // pred_check_branch
        %203 = sbr.rel (%p200) target = $region28
      $region27: #{tpu_custom_call.1} parent=5 // pred_region
        %s204 = ssub.s32 %s16, 1
        %s205 = sand.u32 %s43, 1
        %s206 = scalar_lea.sflag [#allocation3], %s205
        %s207 = sand.u32 %s43, 1
        %s208 = smul.addr %s207, 8
        %s209 = scalar_lea.vmem [#allocation2], %s208
        // Predicated region
        $region29: #{tpu_custom_call.1} parent=27 // pred_check
          %p210 = pneg %p56
        $region30: #{tpu_custom_call.1} parent=27 // pred_check_branch
          %212 = sbr.rel (%p210) target = $region32
        $region31: #{tpu_custom_call.1} parent=27 // pred_region
          %214 = dma.done %s206, 128
        $region32: #{tpu_custom_call.1} parent=27 // pred_fallthru
          _
        %s215 = sand.u32 %s71, 1
        %s216 = scalar_lea.sflag [#allocation5], %s215
        %s217 = sand.u32 %s71, 1
        %s218 = smul.addr %s217, 2
        %s219 = scalar_lea.vmem [#allocation4], %s218
        // Predicated region
        $region33: #{tpu_custom_call.1} parent=27 // pred_check
          %p220 = pneg %p84
        $region34: #{tpu_custom_call.1} parent=27 // pred_check_branch
          %222 = sbr.rel (%p220) target = $region36
        $region35: #{tpu_custom_call.1} parent=27 // pred_region
          %224 = dma.done %s216, 32
        $region36: #{tpu_custom_call.1} parent=27 // pred_fallthru
          _
        %s225 = sand.u32 %s43, 1
        %s226 = scalar_lea.sflag [#allocation3], %s225
        %s227 = sand.u32 %s43, 1
        %s228 = smul.addr %s227, 8
        %s229 = scalar_lea.vmem [#allocation2], %s228
        %p230 = pneg %p56
        %p231 = pneg %p53
        %s232 = sand.u32 %s71, 1
        %s233 = scalar_lea.sflag [#allocation5], %s232
        %s234 = sand.u32 %s71, 1
        %s235 = smul.addr %s234, 2
        %s236 = scalar_lea.vmem [#allocation4], %s235
        %p237 = pneg %p84
        %p238 = pneg %p81
        %p239 = pneg %p110
        %p240 = pneg %p107
        %p241 = scmp.lt.s32.totalorder %s25, 1
        %s242 = scalar_select %p241, %s25, 1
        %s243 = smul.addr %s242, 4
        %s244 = scalar_lea.vmem %s2, %s243
        %p245 = pneg %p136
        %p246 = pneg %p133
        %p247 = scmp.lt.s32.totalorder %s25, 1
        %s248 = scalar_select %p247, %s25, 1
        %s249 = smul.addr %s248, 4
        %s250 = scalar_lea.vmem %s3, %s249
        %p251 = scmp.lt.s32.totalorder %s25, 1
        %s252 = scalar_select %p251, %s25, 1
        %s253 = smul.addr %s252, 4
        %s254 = scalar_lea.vmem %s2, %s253
        %p255 = scmp.lt.s32.totalorder %s25, 1
        %s256 = scalar_select %p255, %s25, 1
        %s257 = smul.addr %s256, 4
        %s258 = scalar_lea.vmem %s3, %s257
        %p259 = scmp.eq.s32.totalorder %s26, 0
        // Predicated region
        $region37: #{tpu_custom_call.1} parent=27 // pred_check
          %p260 = pneg %p259
        $region38: #{tpu_custom_call.1} parent=27 // pred_check_branch
          %262 = sbr.rel (%p260) target = $region40
        $region39: #{tpu_custom_call.1} parent=27 // pred_region
          %vm263 = vcmask 0
          %264 = vst.msk [vmem:[%s254] sm:$0x1] %vm263, 0.0
          %265 = vst.msk [vmem:[%s254 + $0x1] sm:$0x1] %vm263, 0.0
          %266 = vst.msk [vmem:[%s254 + $0x2] sm:$0x1] %vm263, 0.0
          %267 = vst.msk [vmem:[%s254 + $0x3] sm:$0x1] %vm263, 0.0
          %268 = vst.msk [vmem:[%s258] sm:$0x1] %vm263, 0.0
          %269 = vst.msk [vmem:[%s258 + $0x1] sm:$0x1] %vm263, 0.0
          %270 = vst.msk [vmem:[%s258 + $0x2] sm:$0x1] %vm263, 0.0
          %271 = vst.msk [vmem:[%s258 + $0x3] sm:$0x1] %vm263, 0.0
        $region40: #{tpu_custom_call.1} parent=27 // pred_fallthru
          _
        %v272 = vld [vmem:[%s219] sm:$0x3]
        %v273 = vld [vmem:[%s209] sm:$0x3]
        %s274 = scalar_lea.vmem %s209, 2 [#allocation2]
        %v275 = vld [vmem:[%s274] sm:$0x3]
        %s276 = scalar_lea.vmem %s209, 4 [#allocation2]
        %v277 = vld [vmem:[%s276] sm:$0x3]
        %s278 = scalar_lea.vmem %s209, 6 [#allocation2]
        %v279 = vld [vmem:[%s278] sm:$0x3]
        %v280 = vmax.f32 %v273, %v275
        %v281 = vmax.f32 %v280, %v277
        %v282 = vmax.f32 %v281, %v279
        %v283 = vsub.f32 %v273, %v282
        %v284 = vmul.f32 %v283, 1.442695
        %v285 = vpow.pop %v284
        %v286 = vsub.f32 %v275, %v282
        %v287 = vmul.f32 %v286, 1.442695
        %v288 = vpow.pop %v287
        %v289 = vsub.f32 %v277, %v282
        %v290 = vmul.f32 %v289, 1.442695
        %v291 = vpow.pop %v290
        %v292 = vsub.f32 %v279, %v282
        %v293 = vmul.f32 %v292, 1.442695
        %v294 = vpow.pop %v293
        %v295 = vadd.f32 %v285, %v288
        %v296 = vadd.f32 %v295, %v291
        %v297 = vadd.f32 %v296, %v294
        %v298 = vrcp.pop %v297
        %v299 = vmul.f32 %v297, %v298
        %v300 = vsub.f32 1.0, %v299
        %v301 = vmul.f32 %v298, %v300
        %v302 = vadd.f32 %v298, %v301
        %vm303 = vweird.f32 %v297
        %vm304 = vweird.f32 %v298
        %vm305 = vmor %vm303, %vm304
        %v306 = vsel %vm305, %v298, %v302
        %v307 = vand.u32 2147483647, %v297
        %vm308 = vcmp.eq.f32.partialorder %v307, 8.507059e+37
        %v309 = vand.u32 %v297, 2147483648
        %v310 = vor.u32 1.1754944e-38, %v309
        %v311 = vsel %vm308, %v310, %v306
        %v312 = vmul.f32 %v285, %v311
        %vm313 = vcmp.eq.s32.totalorder %v272, 0
        %v314 = vsel %vm313, %v312, 0.0
        %vm315 = vcmask 1041408
        %v316 = vsel %vm315, %v314, 0.0
        %317 = vadd.xlane.f32.xlu0 %v316
        %v318 = vpop.xlane.xlu0 %317
        %v319 = vsel %vm315, %v318, 0.0
        %v320 = vrot.slane %v319, 4
        %v321 = vadd.f32 %v319, %v320
        %v322 = vrot.slane %v321, 2
        %v323 = vadd.f32 %v321, %v322
        %v324 = vrot.slane %v323, 1
        %v325 = vadd.f32 %v323, %v324
        %v326 = vsel %vm313, 1, 0
        %v327 = vcvt.s32.f32 %v326
        %v328 = vsel %vm315, %v327, 0.0
        %329 = vadd.xlane.f32.xlu0 %v328
        %v330 = vpop.xlane.xlu0 %329
        %v331 = vsel %vm315, %v330, 0.0
        %v332 = vrot.slane %v331, 4
        %v333 = vadd.f32 %v331, %v332
        %v334 = vrot.slane %v333, 2
        %v335 = vadd.f32 %v333, %v334
        %v336 = vrot.slane %v335, 1
        %v337 = vadd.f32 %v335, %v336
        %v338 = vsel %vm315, %v312, 0.0
        %339 = vadd.xlane.f32.xlu0 %v338
        %v340 = vpop.xlane.xlu0 %339
        %v341 = vsel %vm315, %v340, 0.0
        %v342 = vrot.slane %v341, 4
        %v343 = vadd.f32 %v341, %v342
        %v344 = vrot.slane %v343, 2
        %v345 = vadd.f32 %v343, %v344
        %v346 = vrot.slane %v345, 1
        %v347 = vadd.f32 %v345, %v346
        %v348 = vadd.f32 %v347, %v337
        %v349 = vsub.f32 %v348, %v325
        %v350 = vld [vmem:[%s254] sm:$0x1]
        %v351 = vadd.f32 %v350, %v325
        %vm352 = vcmask 0
        %353 = vst.msk [vmem:[%s254] sm:$0x1] %vm352, %v351
        %v354 = vld [vmem:[%s258] sm:$0x1]
        %v355 = vadd.f32 %v354, %v349
        %356 = vst.msk [vmem:[%s258] sm:$0x1] %vm352, %v355
        %v357 = vmul.f32 %v288, %v311
        %vm358 = vcmp.eq.s32.totalorder %v272, 1
        %v359 = vsel %vm358, %v357, 0.0
        %v360 = vsel %vm315, %v359, 0.0
        %361 = vadd.xlane.f32.xlu0 %v360
        %v362 = vpop.xlane.xlu0 %361
        %v363 = vsel %vm315, %v362, 0.0
        %v364 = vrot.slane %v363, 4
        %v365 = vadd.f32 %v363, %v364
        %v366 = vrot.slane %v365, 2
        %v367 = vadd.f32 %v365, %v366
        %v368 = vrot.slane %v367, 1
        %v369 = vadd.f32 %v367, %v368
        %v370 = vsel %vm358, 1, 0
        %v371 = vcvt.s32.f32 %v370
        %v372 = vsel %vm315, %v371, 0.0
        %373 = vadd.xlane.f32.xlu0 %v372
        %v374 = vpop.xlane.xlu0 %373
        %v375 = vsel %vm315, %v374, 0.0
        %v376 = vrot.slane %v375, 4
        %v377 = vadd.f32 %v375, %v376
        %v378 = vrot.slane %v377, 2
        %v379 = vadd.f32 %v377, %v378
        %v380 = vrot.slane %v379, 1
        %v381 = vadd.f32 %v379, %v380
        %v382 = vsel %vm315, %v357, 0.0
        %383 = vadd.xlane.f32.xlu0 %v382
        %v384 = vpop.xlane.xlu0 %383
        %v385 = vsel %vm315, %v384, 0.0
        %v386 = vrot.slane %v385, 4
        %v387 = vadd.f32 %v385, %v386
        %v388 = vrot.slane %v387, 2
        %v389 = vadd.f32 %v387, %v388
        %v390 = vrot.slane %v389, 1
        %v391 = vadd.f32 %v389, %v390
        %v392 = vadd.f32 %v391, %v381
        %v393 = vsub.f32 %v392, %v369
        %s394 = scalar_lea.vmem %s254, 1
        %v395 = vld [vmem:[%s394] sm:$0x1]
        %v396 = vadd.f32 %v395, %v369
        %397 = vst.msk [vmem:[%s394] sm:$0x1] %vm352, %v396
        %s398 = scalar_lea.vmem %s258, 1
        %v399 = vld [vmem:[%s398] sm:$0x1]
        %v400 = vadd.f32 %v399, %v393
        %401 = vst.msk [vmem:[%s398] sm:$0x1] %vm352, %v400
        %v402 = vmul.f32 %v291, %v311
        %vm403 = vcmp.eq.s32.totalorder %v272, 2
        %v404 = vsel %vm403, %v402, 0.0
        %v405 = vsel %vm315, %v404, 0.0
        %406 = vadd.xlane.f32.xlu0 %v405
        %v407 = vpop.xlane.xlu0 %406
        %v408 = vsel %vm315, %v407, 0.0
        %v409 = vrot.slane %v408, 4
        %v410 = vadd.f32 %v408, %v409
        %v411 = vrot.slane %v410, 2
        %v412 = vadd.f32 %v410, %v411
        %v413 = vrot.slane %v412, 1
        %v414 = vadd.f32 %v412, %v413
        %v415 = vsel %vm403, 1, 0
        %v416 = vcvt.s32.f32 %v415
        %v417 = vsel %vm315, %v416, 0.0
        %418 = vadd.xlane.f32.xlu0 %v417
        %v419 = vpop.xlane.xlu0 %418
        %v420 = vsel %vm315, %v419, 0.0
        %v421 = vrot.slane %v420, 4
        %v422 = vadd.f32 %v420, %v421
        %v423 = vrot.slane %v422, 2
        %v424 = vadd.f32 %v422, %v423
        %v425 = vrot.slane %v424, 1
        %v426 = vadd.f32 %v424, %v425
        %v427 = vsel %vm315, %v402, 0.0
        %428 = vadd.xlane.f32.xlu0 %v427
        %v429 = vpop.xlane.xlu0 %428
        %v430 = vsel %vm315, %v429, 0.0
        %v431 = vrot.slane %v430, 4
        %v432 = vadd.f32 %v430, %v431
        %v433 = vrot.slane %v432, 2
        %v434 = vadd.f32 %v432, %v433
        %v435 = vrot.slane %v434, 1
        %v436 = vadd.f32 %v434, %v435
        %v437 = vadd.f32 %v436, %v426
        %v438 = vsub.f32 %v437, %v414
        %s439 = scalar_lea.vmem %s254, 2
        %v440 = vld [vmem:[%s439] sm:$0x1]
        %v441 = vadd.f32 %v440, %v414
        %442 = vst.msk [vmem:[%s439] sm:$0x1] %vm352, %v441
        %s443 = scalar_lea.vmem %s258, 2
        %v444 = vld [vmem:[%s443] sm:$0x1]
        %v445 = vadd.f32 %v444, %v438
        %446 = vst.msk [vmem:[%s443] sm:$0x1] %vm352, %v445
        %v447 = vmul.f32 %v294, %v311
        %vm448 = vcmp.eq.s32.totalorder %v272, 3
        %v449 = vsel %vm448, %v447, 0.0
        %v450 = vsel %vm315, %v449, 0.0
        %451 = vadd.xlane.f32.xlu0 %v450
        %v452 = vpop.xlane.xlu0 %451
        %v453 = vsel %vm315, %v452, 0.0
        %v454 = vrot.slane %v453, 4
        %v455 = vadd.f32 %v453, %v454
        %v456 = vrot.slane %v455, 2
        %v457 = vadd.f32 %v455, %v456
        %v458 = vrot.slane %v457, 1
        %v459 = vadd.f32 %v457, %v458
        %v460 = vsel %vm448, 1, 0
        %v461 = vcvt.s32.f32 %v460
        %v462 = vsel %vm315, %v461, 0.0
        %463 = vadd.xlane.f32.xlu0 %v462
        %v464 = vpop.xlane.xlu0 %463
        %v465 = vsel %vm315, %v464, 0.0
        %v466 = vrot.slane %v465, 4
        %v467 = vadd.f32 %v465, %v466
        %v468 = vrot.slane %v467, 2
        %v469 = vadd.f32 %v467, %v468
        %v470 = vrot.slane %v469, 1
        %v471 = vadd.f32 %v469, %v470
        %v472 = vsel %vm315, %v447, 0.0
        %473 = vadd.xlane.f32.xlu0 %v472
        %v474 = vpop.xlane.xlu0 %473
        %v475 = vsel %vm315, %v474, 0.0
        %v476 = vrot.slane %v475, 4
        %v477 = vadd.f32 %v475, %v476
        %v478 = vrot.slane %v477, 2
        %v479 = vadd.f32 %v477, %v478
        %v480 = vrot.slane %v479, 1
        %v481 = vadd.f32 %v479, %v480
        %v482 = vadd.f32 %v481, %v471
        %v483 = vsub.f32 %v482, %v459
        %s484 = scalar_lea.vmem %s254, 3
        %v485 = vld [vmem:[%s484] sm:$0x1]
        %v486 = vadd.f32 %v485, %v459
        %487 = vst.msk [vmem:[%s484] sm:$0x1] %vm352, %v486
        %s488 = scalar_lea.vmem %s258, 3
        %v489 = vld [vmem:[%s488] sm:$0x1]
        %v490 = vadd.f32 %v489, %v483
        %491 = vst.msk [vmem:[%s488] sm:$0x1] %vm352, %v490
        %p492 = scmp.lt.s32.totalorder %s25, 1
        %s493 = scalar_select %p492, %s25, 1
        %s494 = smul.addr %s493, 4
        %s495 = scalar_lea.vmem %s2, %s494
        %p496 = scmp.lt.s32.totalorder %s25, 1
        %s497 = scalar_select %p496, %s25, 1
        %s498 = smul.addr %s497, 4
        %s499 = scalar_lea.vmem %s3, %s498
        // Predicated region
        $region41: #{tpu_custom_call.1} parent=27 // pred_check
          %p500 = pneg %p107
        $region42: #{tpu_custom_call.1} parent=27 // pred_check_branch
          %502 = sbr.rel (%p500) target = $region44
        $region43: #{tpu_custom_call.1} parent=27 // pred_region
          _
        $region44: #{tpu_custom_call.1} parent=27 // pred_fallthru
          _
        // Predicated region
        $region45: #{tpu_custom_call.1} parent=27 // pred_check
          %p503 = pneg %p133
        $region46: #{tpu_custom_call.1} parent=27 // pred_check_branch
          %505 = sbr.rel (%p503) target = $region48
        $region47: #{tpu_custom_call.1} parent=27 // pred_region
          _
        $region48: #{tpu_custom_call.1} parent=27 // pred_fallthru
          _
      $region28: #{tpu_custom_call.1} parent=5 // pred_fallthru
        _
      %p506 = scmp.le.s32.totalorder 2, %s16
      // Predicated region
      $region49: #{tpu_custom_call.1} parent=5 // pred_check
        %p507 = pneg %p506
      $region50: #{tpu_custom_call.1} parent=5 // pred_check_branch
        %509 = sbr.rel (%p507) target = $region52
      $region51: #{tpu_custom_call.1} parent=5 // pred_region
        %s510 = ssub.s32 %s16, 2
        // Predicated region
        $region53: #{tpu_custom_call.1} parent=51 // pred_check
          %p511 = pneg %p113
        $region54: #{tpu_custom_call.1} parent=51 // pred_check_branch
          %513 = sbr.rel (%p511) target = $region56
        $region55: #{tpu_custom_call.1} parent=51 // pred_region
          %p514 = scmp.lt.s32.totalorder %s27, 1
          %s515 = scalar_select %p514, %s27, 1
          %s516 = smul.addr %s515, 4
          %s517 = scalar_lea.vmem %s2, %s516
        $region56: #{tpu_custom_call.1} parent=51 // pred_fallthru
          _
        // Predicated region
        $region57: #{tpu_custom_call.1} parent=51 // pred_check
          %p518 = pneg %p139
        $region58: #{tpu_custom_call.1} parent=51 // pred_check_branch
          %520 = sbr.rel (%p518) target = $region60
        $region59: #{tpu_custom_call.1} parent=51 // pred_region
          %p521 = scmp.lt.s32.totalorder %s27, 1
          %s522 = scalar_select %p521, %s27, 1
          %s523 = smul.addr %s522, 4
          %s524 = scalar_lea.vmem %s3, %s523
        $region60: #{tpu_custom_call.1} parent=51 // pred_fallthru
          _
      $region52: #{tpu_custom_call.1} parent=5 // pred_fallthru
        _
    $region6: #{tpu_custom_call.1} parent=1 // loop_footer
      %s20 = sadd.s32 1, %s16
    $region7: #{tpu_custom_call.1} parent=1 // loop_footer_branch
      %15 = sbr.rel target = $region3
    $region8: #{tpu_custom_call.1} parent=1 // loop_exit
      _
    %525 = vsyncpa [#allocation3], 1
    %s526 = scalar_lea.sflag [#allocation3], 1
    %527 = vsyncpa %s526, 1
    %528 = vsyncpa [#allocation5], 1
    %s529 = scalar_lea.sflag [#allocation5], 1
    %530 = vsyncpa %s529, 1

</llo_original>
